<compile_context>
chip_gen: v6e
topology: v6e:2x2x1
jax: 0.10.0
libtpu: 0.0.40
codegen_flags: <defaults>
</compile_context>

<pallas_src>
import functools

import jax
import jax.numpy as jnp
from jax.experimental import pallas as pl
from jax.experimental.pallas import tpu as pltpu

EPS = 1e-5


def _round_up(n, m):
    return (n + m - 1) // m * m


def _mlp_kernel(x_ref, w1_ref, gamma_ref, beta_ref, w2_ref, b2_ref,
                o_ref, acc_ref, *, batch, eps):
    """Grid = (P-tiles [parallel], H-tiles [arbitrary / reduction])."""
    k = pl.program_id(1)

    @pl.when(k == 0)
    def _():
        acc_ref[...] = jnp.zeros_like(acc_ref)

    # ---- Linear 1 on this H-tile (MXU, f32 accumulation). ------------------
    # b1 is intentionally skipped: a per-feature constant is cancelled exactly
    # by the BatchNorm mean subtraction that follows.
    h = jnp.dot(x_ref[...], w1_ref[...],
                preferred_element_type=jnp.float32)            # (B, tH) f32

    # ---- BatchNorm1d (training mode, biased variance), one-pass stats. -----
    # Padded batch rows are exactly zero (zero-padded x, no bias), so they
    # contribute nothing to the sums; divide by the *real* batch size.
    inv_b = 1.0 / batch
    s = jnp.sum(h, axis=0, keepdims=True)                      # (1, tH)  XLU
    ss = jnp.sum(h * h, axis=0, keepdims=True)                 # (1, tH)  XLU
    mean = s * inv_b
    var = jnp.maximum(ss * inv_b - mean * mean, 0.0)
    scale = jax.lax.rsqrt(var + eps) * gamma_ref[...].astype(jnp.float32)
    shift = beta_ref[...].astype(jnp.float32) - mean * scale

    # ---- BN affine + ReLU, fused. ------------------------------------------
    a = jnp.maximum(h * scale + shift, 0.0)                    # (B, tH) f32

    # ---- Linear 2 partial product: accumulate into VMEM scratch. -----------
    acc_ref[...] += jnp.dot(a.astype(w2_ref.dtype), w2_ref[...],
                            preferred_element_type=jnp.float32)

    @pl.when(k == pl.num_programs(1) - 1)
    def _():
        o_ref[...] = (acc_ref[...] +
                      b2_ref[...].astype(jnp.float32)).astype(o_ref.dtype)


@functools.partial(jax.jit, static_argnames=("block_h", "block_p", "eps"))
def mlp_forward(x, w1, b1, gamma, beta, w2, b2, *,
                block_h=128, block_p=128, eps=EPS):
    """Fused Linear -> BatchNorm1d(train) -> ReLU -> Linear.

    x: (B, D); w1: (D, H); w2: (H, P) (pre-transposed vs. PyTorch layout).
    x / w1 / w2 may be float32 or bfloat16 (f32 accumulation either way).
    """
    B, D = x.shape
    H = w1.shape[1]
    P = w2.shape[1]

    # TPU-friendly padded shapes: lane (last) dims multiple of 128 so loads /
    # stores are unmasked and the output is lane-dense; sublane multiple of 8.
    Bp = _round_up(B, 8)
    Dp = _round_up(D, 128)
    Hp = _round_up(H, block_h)
    Pp = _round_up(P, block_p)

    xp = jnp.pad(x, ((0, Bp - B), (0, Dp - D)))
    w1p = jnp.pad(w1, ((0, Dp - D), (0, Hp - H)))
    gp = jnp.pad(gamma.reshape(1, -1), ((0, 0), (0, Hp - H)))
    bp = jnp.pad(beta.reshape(1, -1), ((0, 0), (0, Hp - H)))
    w2p = jnp.pad(w2, ((0, Hp - H), (0, Pp - P)))
    b2p = jnp.pad(b2.reshape(1, -1), ((0, 0), (0, Pp - P)))
    del b1  # cancelled exactly by the BatchNorm mean subtraction

    n_p = Pp // block_p   # independent output tiles -> "parallel"
    n_h = Hp // block_h   # reduction over hidden features -> "arbitrary"

    kernel = functools.partial(_mlp_kernel, batch=float(B), eps=eps)

    out = pl.pallas_call(
        kernel,
        out_shape=jax.ShapeDtypeStruct((Bp, Pp), jnp.float32),
        grid_spec=pltpu.PrefetchScalarGridSpec(
            num_scalar_prefetch=0,
            grid=(n_p, n_h),
            in_specs=[
                pl.BlockSpec((Bp, Dp), lambda p, k: (0, 0)),            # x (resident)
                pl.BlockSpec((Dp, block_h), lambda p, k: (0, k)),       # w1 tile
                pl.BlockSpec((1, block_h), lambda p, k: (0, k)),        # gamma tile
                pl.BlockSpec((1, block_h), lambda p, k: (0, k)),        # beta tile
                pl.BlockSpec((block_h, block_p), lambda p, k: (k, p)),  # w2 tile
                pl.BlockSpec((1, block_p), lambda p, k: (0, p)),        # b2 tile
            ],
            out_specs=pl.BlockSpec((Bp, block_p), lambda p, k: (0, p)),
            scratch_shapes=[pltpu.VMEM((Bp, block_p), jnp.float32)],
        ),
        compiler_params=pltpu.CompilerParams(
            dimension_semantics=("parallel", "arbitrary"),
            vmem_limit_bytes=32 * 1024 * 1024,
        ),
    )(xp, w1p, gp, bp, w2p, b2p)

    return out[:B, :P]


def init_params(key, dim, hidden, proj):
    """PyTorch-like init: nn.Linear U(-k, k), k=1/sqrt(fan_in); BN gamma=1, beta=0."""
    k1, k2, k3, k4 = jax.random.split(key, 4)
    bound1 = 1.0 / jnp.sqrt(dim)
    bound2 = 1.0 / jnp.sqrt(hidden)
    w1 = jax.random.uniform(k1, (dim, hidden), jnp.float32, -bound1, bound1)
    b1 = jax.random.uniform(k2, (1, hidden), jnp.float32, -bound1, bound1)
    w2 = jax.random.uniform(k3, (hidden, proj), jnp.float32, -bound2, bound2)
    b2 = jax.random.uniform(k4, (1, proj), jnp.float32, -bound2, bound2)
    gamma = jnp.ones((1, hidden), jnp.float32)
    beta = jnp.zeros((1, hidden), jnp.float32)
    return w1, b1, gamma, beta, w2, b2


def reference_forward(x, w1, b1, gamma, beta, w2, b2):
    """Pure-JAX reference (matches PyTorch training-mode forward)."""
    h = x @ w1 + b1
    mean = jnp.mean(h, axis=0, keepdims=True)
    var = jnp.mean((h - mean) ** 2, axis=0, keepdims=True)
    hn = (h - mean) * jax.lax.rsqrt(var + EPS) * gamma + beta
    a = jnp.maximum(hn, 0.0)
    return a @ w2 + b2


# TODO(synk): BatchNorm1d running_mean / running_var updates are not tracked
# (forward-only kernel using batch statistics, like the PyTorch training pass).

if __name__ == "__main__":
    # Small but non-trivial shapes: H=512 with block_h=128 gives a 4-step
    # reduction grid (exercises the accumulator + pipelining); P=32 exercises
    # the lane-dense padding path.
    B, DIM, HIDDEN, PROJ = 8, 32, 512, 32

    key = jax.random.PRNGKey(0)
    kx, kp = jax.random.split(key)
    x = jax.random.normal(kx, (B, DIM), jnp.float32)
    params = init_params(kp, DIM, HIDDEN, PROJ)

    # f32 path: strict check against the reference.
    out = jax.block_until_ready(mlp_forward(x, *params))
    ref = reference_forward(x, *params)
    assert out.shape == (B, PROJ)
    assert jnp.allclose(out, ref, atol=2e-4, rtol=2e-4), "f32 mismatch vs reference"

    # bf16-storage / f32-accumulation path (v6e/v7x MXU peak, half the HBM
    # and VMEM traffic); loose tolerance since inputs are quantized to bf16.
    w1, b1, gamma, beta, w2, b2 = params
    out_bf16 = jax.block_until_ready(
        mlp_forward(x.astype(jnp.bfloat16), w1.astype(jnp.bfloat16), b1,
                    gamma, beta, w2.astype(jnp.bfloat16), b2))
    assert out_bf16.shape == (B, PROJ)
    assert float(jnp.max(jnp.abs(out_bf16 - ref))) < 1e-1, "bf16 path too far off"

    print("KERNEL_OK")
</pallas_src>

<mosaic_0001>
module attributes {stable_mosaic.version = 11 : i64} {
  func.func @_mlp_kernel(%arg0: i32, %arg1: i32, %arg2: memref<8x128xf32, #tpu.memory_space<vmem>>, %arg3: memref<128x128xf32, #tpu.memory_space<vmem>>, %arg4: memref<1x128xf32, #tpu.memory_space<vmem>>, %arg5: memref<1x128xf32, #tpu.memory_space<vmem>>, %arg6: memref<128x128xf32, #tpu.memory_space<vmem>>, %arg7: memref<1x128xf32, #tpu.memory_space<vmem>>, %arg8: memref<8x128xf32, #tpu.memory_space<vmem>>, %arg9: memref<8x128xf32, #tpu.memory_space<vmem>>) attributes {dimension_semantics = [#tpu.dimension_semantics<parallel>, #tpu.dimension_semantics<arbitrary>], iteration_bounds = array<i64: 1, 4>, scalar_prefetch = 0 : i64, scratch_operands = 1 : i64, tpu.core_type = #tpu.core_type<tc>, window_params = [{pipeline_mode = #tpu.pipeline_mode<synchronous>, transform_indices = @transform_0, window_bounds = array<i64: 8, 128>}, {transform_indices = @transform_1, window_bounds = array<i64: 128, 128>}, {transform_indices = @transform_2, window_bounds = array<i64: 1, 128>}, {transform_indices = @transform_3, window_bounds = array<i64: 1, 128>}, {transform_indices = @transform_4, window_bounds = array<i64: 128, 128>}, {transform_indices = @transform_5, window_bounds = array<i64: 1, 128>}, {transform_indices = @transform_6, window_bounds = array<i64: 8, 128>}]} {
    %c0_i32 = arith.constant 0 : i32
    %0 = arith.cmpi eq, %arg1, %c0_i32 : i32
    %1 = arith.extui %0 : i1 to i32
    %c0_i32_0 = arith.constant 0 : i32
    %2 = arith.cmpi ne, %1, %c0_i32_0 : i32
    scf.if %2 {
      %cst_23 = arith.constant 0.000000e+00 : f32
      %41 = vector.broadcast %cst_23 : f32 to vector<8x128xf32>
      %c0_24 = arith.constant 0 : index
      %c0_25 = arith.constant 0 : index
      %42 = vector.load %arg9[%c0_24, %c0_25] : memref<8x128xf32, #tpu.memory_space<vmem>>, vector<8x128xf32>
      tpu.vector_store %arg9[%c0_24, %c0_25], %41 {strides = array<i32>} : memref<8x128xf32, #tpu.memory_space<vmem>>, vector<8x128xf32>,
    } else {
    }
    %c0 = arith.constant 0 : index
    %c0_1 = arith.constant 0 : index
    %3 = vector.load %arg2[%c0, %c0_1] : memref<8x128xf32, #tpu.memory_space<vmem>>, vector<8x128xf32>
    %c0_2 = arith.constant 0 : index
    %c0_3 = arith.constant 0 : index
    %4 = vector.load %arg3[%c0_2, %c0_3] : memref<128x128xf32, #tpu.memory_space<vmem>>, vector<128x128xf32>
    %cst = arith.constant dense<0.000000e+00> : vector<8x128xf32>
    %5 = tpu.matmul %3, %4, %cst {dimension_numbers = #tpu.dot_dimension_numbers<[1], [0], [0], [1], [0, 0, 1, 1], [], []>} : vector<8x128xf32>, vector<128x128xf32>, vector<8x128xf32> -> vector<8x128xf32>
    %cst_4 = arith.constant dense<0.000000e+00> : vector<128xf32>
    %6 = vector.multi_reduction <add>, %5, %cst_4 [0] : vector<8x128xf32> to vector<128xf32>
    %7 = vector.shape_cast %6 : vector<128xf32> to vector<1x128xf32>
    %8 = arith.mulf %5, %5 : vector<8x128xf32>
    %cst_5 = arith.constant dense<0.000000e+00> : vector<128xf32>
    %9 = vector.multi_reduction <add>, %8, %cst_5 [0] : vector<8x128xf32> to vector<128xf32>
    %10 = vector.shape_cast %9 : vector<128xf32> to vector<1x128xf32>
    %cst_6 = arith.constant 1.250000e-01 : f32
    %11 = vector.broadcast %cst_6 : f32 to vector<1x128xf32>
    %12 = arith.mulf %7, %11 : vector<1x128xf32>
    %cst_7 = arith.constant 1.250000e-01 : f32
    %13 = vector.broadcast %cst_7 : f32 to vector<1x128xf32>
    %14 = arith.mulf %10, %13 : vector<1x128xf32>
    %15 = arith.mulf %12, %12 : vector<1x128xf32>
    %16 = arith.subf %14, %15 : vector<1x128xf32>
    %cst_8 = arith.constant 0.000000e+00 : f32
    %17 = vector.broadcast %cst_8 : f32 to vector<1x128xf32>
    %18 = arith.maximumf %16, %17 : vector<1x128xf32>
    %cst_9 = arith.constant 9.99999974E-6 : f32
    %19 = vector.broadcast %cst_9 : f32 to vector<1x128xf32>
    %20 = arith.addf %18, %19 : vector<1x128xf32>
    %21 = math.rsqrt %20 : vector<1x128xf32>
    %c0_10 = arith.constant 0 : index
    %c0_11 = arith.constant 0 : index
    %22 = vector.load %arg4[%c0_10, %c0_11] : memref<1x128xf32, #tpu.memory_space<vmem>>, vector<1x128xf32>
    %23 = arith.mulf %21, %22 : vector<1x128xf32>
    %c0_12 = arith.constant 0 : index
    %c0_13 = arith.constant 0 : index
    %24 = vector.load %arg5[%c0_12, %c0_13] : memref<1x128xf32, #tpu.memory_space<vmem>>, vector<1x128xf32>
    %25 = arith.mulf %12, %23 : vector<1x128xf32>
    %26 = arith.subf %24, %25 : vector<1x128xf32>
    %27 = vector.broadcast %23 : vector<1x128xf32> to vector<8x128xf32>
    %28 = arith.mulf %5, %27 : vector<8x128xf32>
    %29 = vector.broadcast %26 : vector<1x128xf32> to vector<8x128xf32>
    %30 = arith.addf %28, %29 : vector<8x128xf32>
    %cst_14 = arith.constant 0.000000e+00 : f32
    %31 = vector.broadcast %cst_14 : f32 to vector<8x128xf32>
    %32 = arith.maximumf %30, %31 : vector<8x128xf32>
    %c0_15 = arith.constant 0 : index
    %c0_16 = arith.constant 0 : index
    %33 = vector.load %arg9[%c0_15, %c0_16] : memref<8x128xf32, #tpu.memory_space<vmem>>, vector<8x128xf32>
    %c0_17 = arith.constant 0 : index
    %c0_18 = arith.constant 0 : index
    %34 = vector.load %arg6[%c0_17, %c0_18] : memref<128x128xf32, #tpu.memory_space<vmem>>, vector<128x128xf32>
    %cst_19 = arith.constant dense<0.000000e+00> : vector<8x128xf32>
    %35 = tpu.matmul %32, %34, %cst_19 {dimension_numbers = #tpu.dot_dimension_numbers<[1], [0], [0], [1], [0, 0, 1, 1], [], []>} : vector<8x128xf32>, vector<128x128xf32>, vector<8x128xf32> -> vector<8x128xf32>
    %36 = arith.addf %33, %35 : vector<8x128xf32>
    %c0_20 = arith.constant 0 : index
    %c0_21 = arith.constant 0 : index
    %37 = vector.load %arg9[%c0_20, %c0_21] : memref<8x128xf32, #tpu.memory_space<vmem>>, vector<8x128xf32>
    tpu.vector_store %arg9[%c0_20, %c0_21], %36 {strides = array<i32>} : memref<8x128xf32, #tpu.memory_space<vmem>>, vector<8x128xf32>,
    %c3_i32 = arith.constant 3 : i32
    %38 = arith.cmpi eq, %arg1, %c3_i32 : i32
    %39 = arith.extui %38 : i1 to i32
    %c0_i32_22 = arith.constant 0 : i32
    %40 = arith.cmpi ne, %39, %c0_i32_22 : i32
    scf.if %40 {
      %c0_23 = arith.constant 0 : index
      %c0_24 = arith.constant 0 : index
      %41 = vector.load %arg9[%c0_23, %c0_24] : memref<8x128xf32, #tpu.memory_space<vmem>>, vector<8x128xf32>
      %c0_25 = arith.constant 0 : index
      %c0_26 = arith.constant 0 : index
      %42 = vector.load %arg7[%c0_25, %c0_26] : memref<1x128xf32, #tpu.memory_space<vmem>>, vector<1x128xf32>
      %43 = vector.broadcast %42 : vector<1x128xf32> to vector<8x128xf32>
      %44 = arith.addf %41, %43 : vector<8x128xf32>
      %c0_27 = arith.constant 0 : index
      %c0_28 = arith.constant 0 : index
      %45 = vector.load %arg8[%c0_27, %c0_28] : memref<8x128xf32, #tpu.memory_space<vmem>>, vector<8x128xf32>
      tpu.vector_store %arg8[%c0_27, %c0_28], %44 {strides = array<i32>} : memref<8x128xf32, #tpu.memory_space<vmem>>, vector<8x128xf32>,
    } else {
    }
    return
  }
  func.func @transform_0(%arg0: i32, %arg1: i32) -> (i32, i32) {
    %c0_i32 = arith.constant 0 : i32
    %c0_i32_0 = arith.constant 0 : i32
    %c0_i32_1 = arith.constant 0 : i32
    return %c0_i32, %c0_i32_0 : i32, i32
  }
  func.func @transform_1(%arg0: i32, %arg1: i32) -> (i32, i32) {
    %c0_i32 = arith.constant 0 : i32
    %c0_i32_0 = arith.constant 0 : i32
    return %c0_i32, %arg1 : i32, i32
  }
  func.func @transform_2(%arg0: i32, %arg1: i32) -> (i32, i32) {
    %c0_i32 = arith.constant 0 : i32
    %c0_i32_0 = arith.constant 0 : i32
    return %c0_i32, %arg1 : i32, i32
  }
  func.func @transform_3(%arg0: i32, %arg1: i32) -> (i32, i32) {
    %c0_i32 = arith.constant 0 : i32
    %c0_i32_0 = arith.constant 0 : i32
    return %c0_i32, %arg1 : i32, i32
  }
  func.func @transform_4(%arg0: i32, %arg1: i32) -> (i32, i32) {
    %c0_i32 = arith.constant 0 : i32
    return %arg1, %arg0 : i32, i32
  }
  func.func @transform_5(%arg0: i32, %arg1: i32) -> (i32, i32) {
    %c0_i32 = arith.constant 0 : i32
    %c0_i32_0 = arith.constant 0 : i32
    return %c0_i32, %arg0 : i32, i32
  }
  func.func @transform_6(%arg0: i32, %arg1: i32) -> (i32, i32) {
    %c0_i32 = arith.constant 0 : i32
    %c0_i32_0 = arith.constant 0 : i32
    return %c0_i32, %arg0 : i32, i32
  }
}

</mosaic_0001>

<llo_original>
// kernel: mlp_forward.1
$region0: #{mlp_forward.1}
  #allocation0 [shape = 'u32[]', space=smem, size = 0x4, offset = 0x4, fixed_abs, tag = 'smem constant byte address 0x4 - core index']
  #allocation1 [shape = 'u32[144,128]{1,0:T(1,128)}', space=vmem, size = 0x12000, scoped, tag = 'internal scratch']
  #allocation2 [shape = 'f32[8,128]{1,0:T(8,128)}', space=vmem, size = 0x1000, scoped, tag = 'scratch operand']
  %s0 = inlined_call_operand.vmem [shape: f32[8,128], index: 0, kind: input, shape index: {}]
  %s1 = inlined_call_operand.vmem [shape: f32[128,512], index: 1, kind: input, shape index: {}]
  %s2 = inlined_call_operand.vmem [shape: f32[1,512], index: 2, kind: input, shape index: {}]
  %s3 = inlined_call_operand.vmem [shape: f32[1,512], index: 3, kind: input, shape index: {}]
  %s4 = inlined_call_operand.vmem [shape: f32[512,128], index: 4, kind: input, shape index: {}]
  %s5 = inlined_call_operand.vmem [shape: f32[1,128], index: 5, kind: input, shape index: {}]
  %s6 = inlined_call_operand.hbm [shape: f32[8,128], index: 6, kind: output, shape index: {}]
  %s7 = sld [smem:[#allocation0]]
  $region103: #{mlp_forward.1} parent=0
    _
  %s9 = ssub.s32 1, %s7
  %s10 = scalar_select 0, %s9, %s7
  $region1: #{mlp_forward.1} parent=0
    #allocation3 [shape = 'u8[131072]{0}', space=vmem, size = 0x20000, scoped, tag = 'input window, operand 1']
    #allocation4 [shape = 'u8[4096]{0}', space=vmem, size = 0x1000, scoped, tag = 'output window, operand 0, single buffered']
    #allocation5 [shape = 's32[2]{0}', space=sflag, size = 0x8, scoped, tag = 'scoped memory for mlp_forward.1']
    %11 = vsyncpa [#allocation5], 0
    loop: start=0, step=1, limit=6
    $region2: #{mlp_forward.1} parent=1 // loop_pre_header
      _
    $region3: #{mlp_forward.1} parent=1 // loop_header
      %s13 = sphi 0, %s17
      %p14 = scmp.ge.s32.totalorder %s13, 6
      %s20 = sphi 0, %s32
      %s21 = sphi 0, %s28
      %s22 = sphi 0, %s20
      %s23 = sphi 0, %s21
      %s24 = sphi 0, %s22
      %s25 = sphi 0, %s23
      %s33 = sphi 0, %s33
      %s35 = sphi 0, %s33
      %s36 = sphi 0, %s35
      %s50 = sphi 0, %s36
      %s56 = sphi 0, %s58
      %s59 = sphi 0, %s56
      %s60 = sphi 0, %s59
      %s76 = sphi 0, %s60
      %s82 = sphi 0, %s84
      %s85 = sphi 0, %s82
      %s86 = sphi 0, %s85
      %s102 = sphi 0, %s86
      %s108 = sphi 0, %s110
      %s111 = sphi 0, %s108
      %s112 = sphi 0, %s111
      %s128 = sphi 0, %s112
      %s136 = sphi 0, %s138
      %s139 = sphi 0, %s136
      %s140 = sphi 0, %s139
      %s156 = sphi 0, %s140
      %s162 = sphi 0, %s164
      %s165 = sphi 0, %s162
      %s166 = sphi 0, %s165
      %s182 = sphi 0, %s166
      %s188 = sphi 0, %s190
      %s191 = sphi 0, %s188
      %s192 = sphi 0, %s191
      %s208 = sphi 0, %s192
    $region4: #{mlp_forward.1} parent=1 // loop_header_branch
      %16 = sbr.rel (%p14) target = $region8
    $region5: #{mlp_forward.1} parent=1 // loop_body
      %s18 = ssub.s32 %s13, 1
      %s19 = ssub.s32 %s13, 2
      %s26 = sadd.s32 1, %s21
      %p27 = scmp.ge.s32.totalorder %s26, 4
      %s28 = scalar_select %p27, 0, %s26
      %s29 = sadd.s32 1, %s20
      %s30 = scalar_select %p27, %s29, %s20
      %p31 = scmp.ge.s32.totalorder %s30, 1
      %s32 = scalar_select %p31, 0, %s30
      %s34 = sadd.s32 %s33, 1
      %p37 = scmp.eq.s32.totalorder %s13, 3
      %p38 = scmp.ne.s32.totalorder %s33, %s35
      %p39 = scmp.eq.s32.totalorder %s13, 0
      %p40 = por %p38, %p39
      %p41 = scmp.ne.s32.totalorder %s33, %s35
      %p42 = scmp.eq.s32.totalorder %s18, 3
      %p43 = por %p41, %p42
      %p44 = scmp.ne.s32.totalorder %s35, %s36
      %p45 = scmp.eq.s32.totalorder %s18, 0
      %p46 = por %p44, %p45
      %p47 = scmp.ne.s32.totalorder %s35, %s36
      %p48 = scmp.eq.s32.totalorder %s19, 3
      %p49 = por %p47, %p48
      %p51 = scmp.ne.s32.totalorder %s36, %s50
      %p52 = scmp.eq.s32.totalorder %s19, 0
      %p53 = por %p51, %p52
      %s54 = ssub.s32 %s21, %s28
      %p55 = scmp.eq.s32.totalorder %s54, 0
      %s57 = sadd.s32 %s56, 1
      %s58 = scalar_select %p55, %s56, %s57
      %p61 = pneg %p55
      %p62 = scmp.eq.s32.totalorder %s13, 3
      %p63 = por %p61, %p62
      %p64 = scmp.ne.s32.totalorder %s56, %s59
      %p65 = scmp.eq.s32.totalorder %s13, 0
      %p66 = por %p64, %p65
      %p67 = scmp.ne.s32.totalorder %s56, %s59
      %p68 = scmp.eq.s32.totalorder %s18, 3
      %p69 = por %p67, %p68
      %p70 = scmp.ne.s32.totalorder %s59, %s60
      %p71 = scmp.eq.s32.totalorder %s18, 0
      %p72 = por %p70, %p71
      %p73 = scmp.ne.s32.totalorder %s59, %s60
      %p74 = scmp.eq.s32.totalorder %s19, 3
      %p75 = por %p73, %p74
      %p77 = scmp.ne.s32.totalorder %s60, %s76
      %p78 = scmp.eq.s32.totalorder %s19, 0
      %p79 = por %p77, %p78
      %s80 = ssub.s32 %s21, %s28
      %p81 = scmp.eq.s32.totalorder %s80, 0
      %s83 = sadd.s32 %s82, 1
      %s84 = scalar_select %p81, %s82, %s83
      %p87 = pneg %p81
      %p88 = scmp.eq.s32.totalorder %s13, 3
      %p89 = por %p87, %p88
      %p90 = scmp.ne.s32.totalorder %s82, %s85
      %p91 = scmp.eq.s32.totalorder %s13, 0
      %p92 = por %p90, %p91
      %p93 = scmp.ne.s32.totalorder %s82, %s85
      %p94 = scmp.eq.s32.totalorder %s18, 3
      %p95 = por %p93, %p94
      %p96 = scmp.ne.s32.totalorder %s85, %s86
      %p97 = scmp.eq.s32.totalorder %s18, 0
      %p98 = por %p96, %p97
      %p99 = scmp.ne.s32.totalorder %s85, %s86
      %p100 = scmp.eq.s32.totalorder %s19, 3
      %p101 = por %p99, %p100
      %p103 = scmp.ne.s32.totalorder %s86, %s102
      %p104 = scmp.eq.s32.totalorder %s19, 0
      %p105 = por %p103, %p104
      %s106 = ssub.s32 %s21, %s28
      %p107 = scmp.eq.s32.totalorder %s106, 0
      %s109 = sadd.s32 %s108, 1
      %s110 = scalar_select %p107, %s108, %s109
      %p113 = pneg %p107
      %p114 = scmp.eq.s32.totalorder %s13, 3
      %p115 = por %p113, %p114
      %p116 = scmp.ne.s32.totalorder %s108, %s111
      %p117 = scmp.eq.s32.totalorder %s13, 0
      %p118 = por %p116, %p117
      %p119 = scmp.ne.s32.totalorder %s108, %s111
      %p120 = scmp.eq.s32.totalorder %s18, 3
      %p121 = por %p119, %p120
      %p122 = scmp.ne.s32.totalorder %s111, %s112
      %p123 = scmp.eq.s32.totalorder %s18, 0
      %p124 = por %p122, %p123
      %p125 = scmp.ne.s32.totalorder %s111, %s112
      %p126 = scmp.eq.s32.totalorder %s19, 3
      %p127 = por %p125, %p126
      %p129 = scmp.ne.s32.totalorder %s112, %s128
      %p130 = scmp.eq.s32.totalorder %s19, 0
      %p131 = por %p129, %p130
      %s132 = ssub.s32 %s21, %s28
      %s133 = ssub.s32 %s20, %s32
      %s134 = sor.u32 %s132, %s133
      %p135 = scmp.eq.s32.totalorder %s134, 0
      %s137 = sadd.s32 %s136, 1
      %s138 = scalar_select %p135, %s136, %s137
      %p141 = pneg %p135
      %p142 = scmp.eq.s32.totalorder %s13, 3
      %p143 = por %p141, %p142
      %p144 = scmp.ne.s32.totalorder %s136, %s139
      %p145 = scmp.eq.s32.totalorder %s13, 0
      %p146 = por %p144, %p145
      %p147 = scmp.ne.s32.totalorder %s136, %s139
      %p148 = scmp.eq.s32.totalorder %s18, 3
      %p149 = por %p147, %p148
      %p150 = scmp.ne.s32.totalorder %s139, %s140
      %p151 = scmp.eq.s32.totalorder %s18, 0
      %p152 = por %p150, %p151
      %p153 = scmp.ne.s32.totalorder %s139, %s140
      %p154 = scmp.eq.s32.totalorder %s19, 3
      %p155 = por %p153, %p154
      %p157 = scmp.ne.s32.totalorder %s140, %s156
      %p158 = scmp.eq.s32.totalorder %s19, 0
      %p159 = por %p157, %p158
      %s160 = ssub.s32 %s20, %s32
      %p161 = scmp.eq.s32.totalorder %s160, 0
      %s163 = sadd.s32 %s162, 1
      %s164 = scalar_select %p161, %s162, %s163
      %p167 = pneg %p161
      %p168 = scmp.eq.s32.totalorder %s13, 3
      %p169 = por %p167, %p168
      %p170 = scmp.ne.s32.totalorder %s162, %s165
      %p171 = scmp.eq.s32.totalorder %s13, 0
      %p172 = por %p170, %p171
      %p173 = scmp.ne.s32.totalorder %s162, %s165
      %p174 = scmp.eq.s32.totalorder %s18, 3
      %p175 = por %p173, %p174
      %p176 = scmp.ne.s32.totalorder %s165, %s166
      %p177 = scmp.eq.s32.totalorder %s18, 0
      %p178 = por %p176, %p177
      %p179 = scmp.ne.s32.totalorder %s165, %s166
      %p180 = scmp.eq.s32.totalorder %s19, 3
      %p181 = por %p179, %p180
      %p183 = scmp.ne.s32.totalorder %s166, %s182
      %p184 = scmp.eq.s32.totalorder %s19, 0
      %p185 = por %p183, %p184
      %s186 = ssub.s32 %s20, %s32
      %p187 = scmp.eq.s32.totalorder %s186, 0
      %s189 = sadd.s32 %s188, 1
      %s190 = scalar_select %p187, %s188, %s189
      %p193 = pneg %p187
      %p194 = scmp.eq.s32.totalorder %s13, 3
      %p195 = por %p193, %p194
      %p196 = scmp.ne.s32.totalorder %s188, %s191
      %p197 = scmp.eq.s32.totalorder %s13, 0
      %p198 = por %p196, %p197
      %p199 = scmp.ne.s32.totalorder %s188, %s191
      %p200 = scmp.eq.s32.totalorder %s18, 3
      %p201 = por %p199, %p200
      %p202 = scmp.ne.s32.totalorder %s191, %s192
      %p203 = scmp.eq.s32.totalorder %s18, 0
      %p204 = por %p202, %p203
      %p205 = scmp.ne.s32.totalorder %s191, %s192
      %p206 = scmp.eq.s32.totalorder %s19, 3
      %p207 = por %p205, %p206
      %p209 = scmp.ne.s32.totalorder %s192, %s208
      %p210 = scmp.eq.s32.totalorder %s19, 0
      %p211 = por %p209, %p210
      %p212 = scmp.le.s32.totalorder 1, %s13
      %p213 = scmp.lt.s32.totalorder %s13, 5
      %p214 = pnand %p212, %p213
      %p215 = pneg %p214
      // Predicated region
      $region9: #{mlp_forward.1} parent=5 // pred_check
        _
      $region10: #{mlp_forward.1} parent=5 // pred_check_branch
        %217 = sbr.rel (%p214) target = $region12
      $region11: #{mlp_forward.1} parent=5 // pred_region
        %s218 = ssub.s32 %s13, 1
        // Predicated region
        $region13: #{mlp_forward.1} parent=11 // pred_check
          %p219 = pneg %p46
        $region14: #{mlp_forward.1} parent=11 // pred_check_branch
          %221 = sbr.rel (%p219) target = $region16
        $region15: #{mlp_forward.1} parent=11 // pred_region
          _
        $region16: #{mlp_forward.1} parent=11 // pred_fallthru
          _
        // Predicated region
        $region17: #{mlp_forward.1} parent=11 // pred_check
          %p222 = pneg %p178
        $region18: #{mlp_forward.1} parent=11 // pred_check_branch
          %224 = sbr.rel (%p222) target = $region20
        $region19: #{mlp_forward.1} parent=11 // pred_region
          %p225 = scmp.lt.s32.totalorder %s22, 0
          %s226 = scalar_select %p225, %s22, 0
          %s227 = scalar_lea.vmem %s5, %s226
        $region20: #{mlp_forward.1} parent=11 // pred_fallthru
          _
      $region12: #{mlp_forward.1} parent=5 // pred_fallthru
        _
      %p228 = scmp.lt.s32.totalorder %s13, 4
      // Predicated region
      $region21: #{mlp_forward.1} parent=5 // pred_check
        %p229 = pneg %p228
      $region22: #{mlp_forward.1} parent=5 // pred_check_branch
        %231 = sbr.rel (%p229) target = $region24
      $region23: #{mlp_forward.1} parent=5 // pred_region
        // Predicated region
        $region25: #{mlp_forward.1} parent=23 // pred_check
          %p232 = pneg %p66
        $region26: #{mlp_forward.1} parent=23 // pred_check_branch
          %234 = sbr.rel (%p232) target = $region28
        $region27: #{mlp_forward.1} parent=23 // pred_region
          %s235 = sand.u32 %s56, 1
          %s236 = sand.u32 %s56, 1
          %s237 = smul.addr %s236, 128
          %s238 = scalar_lea.vmem [#allocation3], %s237
          %s239 = smul.addr %s21, 8
          %s240 = scalar_lea.vmem %s1, %s239
          // Predicated region
          $region29: #{mlp_forward.1} parent=27 // pred_check
            _
          $region30: #{mlp_forward.1} parent=27 // pred_check_branch
            %242 = sbr.rel (0) target = $region32
          $region31: #{mlp_forward.1} parent=27 // pred_region
            // Predicated region
            $region33: #{mlp_forward.1} parent=31 // pred_check
              _
            $region34: #{mlp_forward.1} parent=31 // pred_check_branch
              %244 = sbr.rel (0) target = $region36
            $region35: #{mlp_forward.1} parent=31 // pred_region
              // Predicated region
              $region48: #{mlp_forward.1} parent=35 // pred_check
                _
              $region49: #{mlp_forward.1} parent=35 // pred_check_branch
                %290 = sbr.rel (0) target = $region51
              $region50: #{mlp_forward.1} parent=35 // pred_region
                loop: start=0, step=1, limit=1
                $region52: #{mlp_forward.1} parent=50 // loop_pre_header
                  _
                $region53: #{mlp_forward.1} parent=50 // loop_header
                  %s292 = sphi 0, %s296
                  %p293 = scmp.ge.s32.totalorder %s292, 1
                  %s297 = sphi %s240, %s240
                  %s298 = sphi %s238, %s238
                $region54: #{mlp_forward.1} parent=50 // loop_header_branch
                  %295 = sbr.rel (%p293) target = $region58
                $region55: #{mlp_forward.1} parent=50 // loop_body
                  %v299 = vld [vmem:[%s297] sm:$0xff]
                  %300 = vst [vmem:[%s298] sm:$0xff] %v299
                  %v301 = vld [vmem:[%s297 + $0x20] sm:$0xff]
                  %302 = vst [vmem:[%s298 + $0x8] sm:$0xff] %v301
                  %v303 = vld [vmem:[%s297 + $0x40] sm:$0xff]
                  %304 = vst [vmem:[%s298 + $0x10] sm:$0xff] %v303
                  %v305 = vld [vmem:[%s297 + $0x60] sm:$0xff]
                  %306 = vst [vmem:[%s298 + $0x18] sm:$0xff] %v305
                  %v307 = vld [vmem:[%s297 + $0x80] sm:$0xff]
                  %308 = vst [vmem:[%s298 + $0x20] sm:$0xff] %v307
                  %v309 = vld [vmem:[%s297 + $0xa0] sm:$0xff]
                  %310 = vst [vmem:[%s298 + $0x28] sm:$0xff] %v309
                  %v311 = vld [vmem:[%s297 + $0xc0] sm:$0xff]
                  %312 = vst [vmem:[%s298 + $0x30] sm:$0xff] %v311
                  %v313 = vld [vmem:[%s297 + $0xe0] sm:$0xff]
                  %314 = vst [vmem:[%s298 + $0x38] sm:$0xff] %v313
                  %v315 = vld [vmem:[%s297 + $0x100] sm:$0xff]
                  %316 = vst [vmem:[%s298 + $0x40] sm:$0xff] %v315
                  %v317 = vld [vmem:[%s297 + $0x120] sm:$0xff]
                  %318 = vst [vmem:[%s298 + $0x48] sm:$0xff] %v317
                  %v319 = vld [vmem:[%s297 + $0x140] sm:$0xff]
                  %320 = vst [vmem:[%s298 + $0x50] sm:$0xff] %v319
                  %v321 = vld [vmem:[%s297 + $0x160] sm:$0xff]
                  %322 = vst [vmem:[%s298 + $0x58] sm:$0xff] %v321
                  %v323 = vld [vmem:[%s297 + $0x180] sm:$0xff]
                  %324 = vst [vmem:[%s298 + $0x60] sm:$0xff] %v323
                  %v325 = vld [vmem:[%s297 + $0x1a0] sm:$0xff]
                  %326 = vst [vmem:[%s298 + $0x68] sm:$0xff] %v325
                  %v327 = vld [vmem:[%s297 + $0x1c0] sm:$0xff]
                  %328 = vst [vmem:[%s298 + $0x70] sm:$0xff] %v327
                  %v329 = vld [vmem:[%s297 + $0x1e0] sm:$0xff]
                  %330 = vst [vmem:[%s298 + $0x78] sm:$0xff] %v329
                $region56: #{mlp_forward.1} parent=50 // loop_footer
                  %s296 = sadd.s32 1, %s292
                $region57: #{mlp_forward.1} parent=50 // loop_footer_branch
                  %291 = sbr.rel target = $region53
                $region58: #{mlp_forward.1} parent=50 // loop_exit
                  _
              $region51: #{mlp_forward.1} parent=35 // pred_fallthru
                _
              // Predicated region
              $region59: #{mlp_forward.1} parent=35 // pred_check
                _
              $region60: #{mlp_forward.1} parent=35 // pred_check_branch
                %332 = sbr.rel target = $region62
              $region61: #{mlp_forward.1} parent=35 // pred_region
                _
              $region62: #{mlp_forward.1} parent=35 // pred_fallthru
                _
            $region36: #{mlp_forward.1} parent=31 // pred_fallthru
              _
            // Predicated region
            $region37: #{mlp_forward.1} parent=31 // pred_check
              _
            $region38: #{mlp_forward.1} parent=31 // pred_check_branch
              %246 = sbr.rel target = $region40
            $region39: #{mlp_forward.1} parent=31 // pred_region
              %s248 = ssub.s32 256, 1
              loop: start=0, step=1, limit=1
              $region41: #{mlp_forward.1} parent=39 // loop_pre_header
                _
              $region42: #{mlp_forward.1} parent=39 // loop_header
                %s250 = sphi 0, %s254
                %p251 = scmp.ge.s32.totalorder %s250, 1
                %s255 = sphi %s240, %s240
                %s256 = sphi %s238, %s238
              $region43: #{mlp_forward.1} parent=39 // loop_header_branch
                %253 = sbr.rel (%p251) target = $region47
              $region44: #{mlp_forward.1} parent=39 // loop_body
                %v257 = vld [vmem:[%s255] sm:%s248]
                %258 = vst [vmem:[%s256] sm:%s248] %v257
                %v259 = vld [vmem:[%s255 + $0x20] sm:%s248]
                %260 = vst [vmem:[%s256 + $0x8] sm:%s248] %v259
                %v261 = vld [vmem:[%s255 + $0x40] sm:%s248]
                %262 = vst [vmem:[%s256 + $0x10] sm:%s248] %v261
                %v263 = vld [vmem:[%s255 + $0x60] sm:%s248]
                %264 = vst [vmem:[%s256 + $0x18] sm:%s248] %v263
                %v265 = vld [vmem:[%s255 + $0x80] sm:%s248]
                %266 = vst [vmem:[%s256 + $0x20] sm:%s248] %v265
                %v267 = vld [vmem:[%s255 + $0xa0] sm:%s248]
                %268 = vst [vmem:[%s256 + $0x28] sm:%s248] %v267
                %v269 = vld [vmem:[%s255 + $0xc0] sm:%s248]
                %270 = vst [vmem:[%s256 + $0x30] sm:%s248] %v269
                %v271 = vld [vmem:[%s255 + $0xe0] sm:%s248]
                %272 = vst [vmem:[%s256 + $0x38] sm:%s248] %v271
                %v273 = vld [vmem:[%s255 + $0x100] sm:%s248]
                %274 = vst [vmem:[%s256 + $0x40] sm:%s248] %v273
                %v275 = vld [vmem:[%s255 + $0x120] sm:%s248]
                %276 = vst [vmem:[%s256 + $0x48] sm:%s248] %v275
                %v277 = vld [vmem:[%s255 + $0x140] sm:%s248]
                %278 = vst [vmem:[%s256 + $0x50] sm:%s248] %v277
                %v279 = vld [vmem:[%s255 + $0x160] sm:%s248]
                %280 = vst [vmem:[%s256 + $0x58] sm:%s248] %v279
                %v281 = vld [vmem:[%s255 + $0x180] sm:%s248]
                %282 = vst [vmem:[%s256 + $0x60] sm:%s248] %v281
                %v283 = vld [vmem:[%s255 + $0x1a0] sm:%s248]
                %284 = vst [vmem:[%s256 + $0x68] sm:%s248] %v283
                %v285 = vld [vmem:[%s255 + $0x1c0] sm:%s248]
                %286 = vst [vmem:[%s256 + $0x70] sm:%s248] %v285
                %v287 = vld [vmem:[%s255 + $0x1e0] sm:%s248]
                %288 = vst [vmem:[%s256 + $0x78] sm:%s248] %v287
              $region45: #{mlp_forward.1} parent=39 // loop_footer
                %s254 = sadd.s32 1, %s250
              $region46: #{mlp_forward.1} parent=39 // loop_footer_branch
                %249 = sbr.rel target = $region42
              $region47: #{mlp_forward.1} parent=39 // loop_exit
                _
            $region40: #{mlp_forward.1} parent=31 // pred_fallthru
              _
          $region32: #{mlp_forward.1} parent=27 // pred_fallthru
            _
          %333 = vnop
        $region28: #{mlp_forward.1} parent=23 // pred_fallthru
          _
        // Predicated region
        $region63: #{mlp_forward.1} parent=23 // pred_check
          %p334 = pneg %p92
        $region64: #{mlp_forward.1} parent=23 // pred_check_branch
          %336 = sbr.rel (%p334) target = $region66
        $region65: #{mlp_forward.1} parent=23 // pred_region
          %p337 = scmp.lt.s32.totalorder %s21, 3
          %s338 = scalar_select %p337, %s21, 3
          %s339 = scalar_lea.vmem %s2, %s338
        $region66: #{mlp_forward.1} parent=23 // pred_fallthru
          _
        // Predicated region
        $region67: #{mlp_forward.1} parent=23 // pred_check
          %p340 = pneg %p118
        $region68: #{mlp_forward.1} parent=23 // pred_check_branch
          %342 = sbr.rel (%p340) target = $region70
        $region69: #{mlp_forward.1} parent=23 // pred_region
          %p343 = scmp.lt.s32.totalorder %s21, 3
          %s344 = scalar_select %p343, %s21, 3
          %s345 = scalar_lea.vmem %s3, %s344
        $region70: #{mlp_forward.1} parent=23 // pred_fallthru
          _
        // Predicated region
        $region71: #{mlp_forward.1} parent=23 // pred_check
          %p346 = pneg %p146
        $region72: #{mlp_forward.1} parent=23 // pred_check_branch
          %348 = sbr.rel (%p346) target = $region74
        $region73: #{mlp_forward.1} parent=23 // pred_region
          %s349 = smul.u32 16, %s21
          %p350 = scmp.lt.s32.totalorder %s349, 63
          %s351 = scalar_select %p350, %s349, 63
          %p352 = scmp.lt.s32.totalorder %s20, 0
          %s353 = scalar_select %p352, %s20, 0
          %s354 = sadd.s32 %s353, %s351
          %s355 = smul.addr %s354, 8
          %s356 = scalar_lea.vmem %s4, %s355
          %s357 = smul.u32 16, %s21
        $region74: #{mlp_forward.1} parent=23 // pred_fallthru
          _
      $region24: #{mlp_forward.1} parent=5 // pred_fallthru
        _
      %p358 = scmp.le.s32.totalorder 1, %s13
      %p359 = scmp.lt.s32.totalorder %s13, 5
      %p360 = pnand %p358, %p359
      %p361 = pneg %p360
      // Predicated region
      $region75: #{mlp_forward.1} parent=5 // pred_check
        _
      $region76: #{mlp_forward.1} parent=5 // pred_check_branch
        %363 = sbr.rel (%p360) target = $region78
      $region77: #{mlp_forward.1} parent=5 // pred_region
        %s364 = ssub.s32 %s13, 1
        %s365 = sand.u32 %s59, 1
        %s366 = sand.u32 %s59, 1
        %s367 = smul.addr %s366, 128
        %s368 = scalar_lea.vmem [#allocation3], %s367
        // Predicated region
        $region79: #{mlp_forward.1} parent=77 // pred_check
          %p369 = pneg %p72
        $region80: #{mlp_forward.1} parent=77 // pred_check_branch
          %371 = sbr.rel (%p369) target = $region82
        $region81: #{mlp_forward.1} parent=77 // pred_region
          _
        $region82: #{mlp_forward.1} parent=77 // pred_fallthru
          _
        %p372 = pneg %p46
        %p373 = pneg %p43
        %s374 = sand.u32 %s59, 1
        %s375 = sand.u32 %s59, 1
        %s376 = smul.addr %s375, 128
        %s377 = scalar_lea.vmem [#allocation3], %s376
        %p378 = pneg %p72
        %p379 = pneg %p69
        %p380 = scmp.lt.s32.totalorder %s23, 3
        %s381 = scalar_select %p380, %s23, 3
        %s382 = scalar_lea.vmem %s2, %s381
        %p383 = pneg %p98
        %p384 = pneg %p95
        %p385 = scmp.lt.s32.totalorder %s23, 3
        %s386 = scalar_select %p385, %s23, 3
        %s387 = scalar_lea.vmem %s3, %s386
        %p388 = pneg %p124
        %p389 = pneg %p121
        %s390 = smul.u32 16, %s23
        %p391 = scmp.lt.s32.totalorder %s390, 63
        %s392 = scalar_select %p391, %s390, 63
        %p393 = scmp.lt.s32.totalorder %s22, 0
        %s394 = scalar_select %p393, %s22, 0
        %s395 = sadd.s32 %s394, %s392
        %s396 = smul.addr %s395, 8
        %s397 = scalar_lea.vmem %s4, %s396
        %p398 = pneg %p152
        %p399 = pneg %p149
        %p400 = scmp.lt.s32.totalorder %s22, 0
        %s401 = scalar_select %p400, %s22, 0
        %s402 = scalar_lea.vmem %s5, %s401
        %p403 = pneg %p178
        %p404 = pneg %p175
        %p405 = pneg %p204
        %p406 = pneg %p201
        %p407 = scmp.lt.s32.totalorder %s23, 3
        %s408 = scalar_select %p407, %s23, 3
        %s409 = scalar_lea.vmem %s2, %s408
        %p410 = scmp.lt.s32.totalorder %s23, 3
        %s411 = scalar_select %p410, %s23, 3
        %s412 = scalar_lea.vmem %s3, %s411
        %s413 = smul.u32 16, %s23
        %p414 = scmp.lt.s32.totalorder %s413, 63
        %s415 = scalar_select %p414, %s413, 63
        %p416 = scmp.lt.s32.totalorder %s22, 0
        %s417 = scalar_select %p416, %s22, 0
        %s418 = sadd.s32 %s417, %s415
        %s419 = smul.addr %s418, 8
        %s420 = scalar_lea.vmem %s4, %s419
        %s421 = smul.u32 16, %s23
        %p422 = scmp.lt.s32.totalorder %s22, 0
        %s423 = scalar_select %p422, %s22, 0
        %s424 = scalar_lea.vmem %s5, %s423
        %p425 = scmp.eq.s32.totalorder %s23, 0
        // Predicated region
        $region83: #{mlp_forward.1} parent=77 // pred_check
          %p426 = pneg %p425
        $region84: #{mlp_forward.1} parent=77 // pred_check_branch
          %428 = sbr.rel (%p426) target = $region86
        $region85: #{mlp_forward.1} parent=77 // pred_region
          %429 = vst [vmem:[#allocation2] sm:$0xff] 0.0
        $region86: #{mlp_forward.1} parent=77 // pred_fallthru
          _
        %v430 = vld [vmem:[%s0] sm:$0xff]
        %v431 = vld [vmem:[%s368] sm:$0xff]
        %v432 = vld [vmem:[%s368 + $0x8] sm:$0xff]
        %v433 = vld [vmem:[%s368 + $0x10] sm:$0xff]
        %v434 = vld [vmem:[%s368 + $0x18] sm:$0xff]
        %v435 = vld [vmem:[%s368 + $0x20] sm:$0xff]
        %v436 = vld [vmem:[%s368 + $0x28] sm:$0xff]
        %v437 = vld [vmem:[%s368 + $0x30] sm:$0xff]
        %v438 = vld [vmem:[%s368 + $0x38] sm:$0xff]
        %v439 = vld [vmem:[%s368 + $0x40] sm:$0xff]
        %v440 = vld [vmem:[%s368 + $0x48] sm:$0xff]
        %v441 = vld [vmem:[%s368 + $0x50] sm:$0xff]
        %v442 = vld [vmem:[%s368 + $0x58] sm:$0xff]
        %v443 = vld [vmem:[%s368 + $0x60] sm:$0xff]
        %v444 = vld [vmem:[%s368 + $0x68] sm:$0xff]
        %v445 = vld [vmem:[%s368 + $0x70] sm:$0xff]
        %v446 = vld [vmem:[%s368 + $0x78] sm:$0xff]
        %447 = vmatprep.subr.mxu0 0.0
        %448 = vmatpush1.msra.mxu0 %v446
        %449 = vmatprep.subr.mxu0 0.0
        %450 = vmatpush1.msra.mxu0 %v445
        %451 = vmatprep.subr.mxu0 0.0
        %452 = vmatpush1.msra.mxu0 %v444
        %453 = vmatprep.subr.mxu0 0.0
        %454 = vmatpush1.msra.mxu0 %v443
        %455 = vmatprep.subr.mxu0 0.0
        %456 = vmatpush1.msra.mxu0 %v442
        %457 = vmatprep.subr.mxu0 0.0
        %458 = vmatpush1.msra.mxu0 %v441
        %459 = vmatprep.subr.mxu0 0.0
        %460 = vmatpush1.msra.mxu0 %v440
        %461 = vmatprep.subr.mxu0 0.0
        %462 = vmatpush1.msra.mxu0 %v439
        %463 = vmatprep.subr.mxu0 0.0
        %464 = vmatpush1.msra.mxu0 %v438
        %465 = vmatprep.subr.mxu0 0.0
        %466 = vmatpush1.msra.mxu0 %v437
        %467 = vmatprep.subr.mxu0 0.0
        %468 = vmatpush1.msra.mxu0 %v436
        %469 = vmatprep.subr.mxu0 0.0
        %470 = vmatpush1.msra.mxu0 %v435
        %471 = vmatprep.subr.mxu0 0.0
        %472 = vmatpush1.msra.mxu0 %v434
        %473 = vmatprep.subr.mxu0 0.0
        %474 = vmatpush1.msra.mxu0 %v433
        %475 = vmatprep.subr.mxu0 0.0
        %476 = vmatpush1.msra.mxu0 %v432
        %477 = vmatprep.subr.mxu0 0.0
        %478 = vmatpush1.msra.mxu0 %v431
        %479 = vmatprep.subr.mxu0 0.0
        %480 = vmatpush2.msra.mxu0 0.0
        %481 = vmatprep.subr.mxu0 0.0
        %482 = vmatpush2.msra.mxu0 0.0
        %483 = vmatprep.subr.mxu0 0.0
        %484 = vmatpush2.msra.mxu0 0.0
        %485 = vmatprep.subr.mxu0 0.0
        %486 = vmatpush2.msra.mxu0 0.0
        %487 = vmatprep.subr.mxu0 0.0
        %488 = vmatpush2.msra.mxu0 0.0
        %489 = vmatprep.subr.mxu0 0.0
        %490 = vmatpush2.msra.mxu0 0.0
        %491 = vmatprep.subr.mxu0 0.0
        %492 = vmatpush2.msra.mxu0 0.0
        %493 = vmatprep.subr.mxu0 0.0
        %494 = vmatpush2.msra.mxu0 0.0
        %495 = vmatprep.subr.mxu0 0.0
        %496 = vmatpush2.msra.mxu0 0.0
        %497 = vmatprep.subr.mxu0 0.0
        %498 = vmatpush2.msra.mxu0 0.0
        %499 = vmatprep.subr.mxu0 0.0
        %500 = vmatpush2.msra.mxu0 0.0
        %501 = vmatprep.subr.mxu0 0.0
        %502 = vmatpush2.msra.mxu0 0.0
        %503 = vmatprep.subr.mxu0 0.0
        %504 = vmatpush2.msra.mxu0 0.0
        %505 = vmatprep.subr.mxu0 0.0
        %506 = vmatpush2.msra.mxu0 0.0
        %507 = vmatprep.subr.mxu0 0.0
        %508 = vmatpush2.msra.mxu0 0.0
        %509 = vmatprep.subr.mxu0 0.0
        %510 = vmatpush2.msra.mxu0 0.0
        %511 = vmatprep.mubr.f32.mxu0 0.0
        %512 = vmatmul.mubr.f32.gmra.mxu0 %v430
        %v513 = vpop.f32.mrf.mxu0
        %v514 = vadd.f32 0.0, %v513
        %v515 = vpop.f32.mrf.mxu0
        %516 = vdwg.mxu0
        %v517 = vrot.slane %v514, 4
        %v518 = vadd.f32 %v514, %v517
        %v519 = vrot.slane %v518, 2
        %v520 = vadd.f32 %v518, %v519
        %v521 = vrot.slane %v520, 1
        %v522 = vadd.f32 %v520, %v521
        %v523 = vmul.f32 %v514, %v514
        %v524 = vrot.slane %v523, 4
        %v525 = vadd.f32 %v523, %v524
        %v526 = vrot.slane %v525, 2
        %v527 = vadd.f32 %v525, %v526
        %v528 = vrot.slane %v527, 1
        %v529 = vadd.f32 %v527, %v528
        %v530 = vmul.f32 %v522, 0.125
        %v531 = vmul.f32 %v529, 0.125
        %v532 = vmul.f32 %v530, %v530
        %v533 = vsub.f32 %v531, %v532
        %v534 = vmax.f32 %v533, 0.0
        %v535 = vadd.f32 %v534, 1e-05
        %v536 = vrsqrt.pop %v535
        %v537 = vld [vmem:[%s409] sm:$0x1]
        %v538 = vmul.f32 %v536, %v537
        %v539 = vld [vmem:[%s412] sm:$0x1]
        %v540 = vmul.f32 %v530, %v538
        %v541 = vsub.f32 %v539, %v540
        %v542 = vlaneseq
        %v543 = vshrl.u32 %v542, 7
        %v544 = vsub.s32 0, %v543
        %v545 = vrot.slane %v538, %v544
        %v546 = vmul.f32 %v514, %v545
        %v548 = vlaneseq
        %v549 = vshrl.u32 %v548, 7
        %v550 = vsub.s32 0, %v549
        %v551 = vrot.slane %v541, %v550
        %v553 = vadd.f32 %v546, %v551
        %v554 = vmax.f32 %v553, 0.0
        %v555 = vld [vmem:[#allocation2] sm:$0xff]
        %v556 = vld [vmem:[%s420] sm:$0xff]
        %v557 = vld [vmem:[%s420 + $0x8] sm:$0xff]
        %v558 = vld [vmem:[%s420 + $0x10] sm:$0xff]
        %v559 = vld [vmem:[%s420 + $0x18] sm:$0xff]
        %v560 = vld [vmem:[%s420 + $0x20] sm:$0xff]
        %v561 = vld [vmem:[%s420 + $0x28] sm:$0xff]
        %v562 = vld [vmem:[%s420 + $0x30] sm:$0xff]
        %v563 = vld [vmem:[%s420 + $0x38] sm:$0xff]
        %v564 = vld [vmem:[%s420 + $0x40] sm:$0xff]
        %v565 = vld [vmem:[%s420 + $0x48] sm:$0xff]
        %v566 = vld [vmem:[%s420 + $0x50] sm:$0xff]
        %v567 = vld [vmem:[%s420 + $0x58] sm:$0xff]
        %v568 = vld [vmem:[%s420 + $0x60] sm:$0xff]
        %v569 = vld [vmem:[%s420 + $0x68] sm:$0xff]
        %v570 = vld [vmem:[%s420 + $0x70] sm:$0xff]
        %v571 = vld [vmem:[%s420 + $0x78] sm:$0xff]
        %572 = vmatprep.subr.mxu0 0.0
        %573 = vmatpush1.msra.mxu0 %v571
        %574 = vmatprep.subr.mxu0 0.0
        %575 = vmatpush1.msra.mxu0 %v570
        %576 = vmatprep.subr.mxu0 0.0
        %577 = vmatpush1.msra.mxu0 %v569
        %578 = vmatprep.subr.mxu0 0.0
        %579 = vmatpush1.msra.mxu0 %v568
        %580 = vmatprep.subr.mxu0 0.0
        %581 = vmatpush1.msra.mxu0 %v567
        %582 = vmatprep.subr.mxu0 0.0
        %583 = vmatpush1.msra.mxu0 %v566
        %584 = vmatprep.subr.mxu0 0.0
        %585 = vmatpush1.msra.mxu0 %v565
        %586 = vmatprep.subr.mxu0 0.0
        %587 = vmatpush1.msra.mxu0 %v564
        %588 = vmatprep.subr.mxu0 0.0
        %589 = vmatpush1.msra.mxu0 %v563
        %590 = vmatprep.subr.mxu0 0.0
        %591 = vmatpush1.msra.mxu0 %v562
        %592 = vmatprep.subr.mxu0 0.0
        %593 = vmatpush1.msra.mxu0 %v561
        %594 = vmatprep.subr.mxu0 0.0
        %595 = vmatpush1.msra.mxu0 %v560
        %596 = vmatprep.subr.mxu0 0.0
        %597 = vmatpush1.msra.mxu0 %v559
        %598 = vmatprep.subr.mxu0 0.0
        %599 = vmatpush1.msra.mxu0 %v558
        %600 = vmatprep.subr.mxu0 0.0
        %601 = vmatpush1.msra.mxu0 %v557
        %602 = vmatprep.subr.mxu0 0.0
        %603 = vmatpush1.msra.mxu0 %v556
        %604 = vmatprep.subr.mxu0 0.0
        %605 = vmatpush2.msra.mxu0 0.0
        %606 = vmatprep.subr.mxu0 0.0
        %607 = vmatpush2.msra.mxu0 0.0
        %608 = vmatprep.subr.mxu0 0.0
        %609 = vmatpush2.msra.mxu0 0.0
        %610 = vmatprep.subr.mxu0 0.0
        %611 = vmatpush2.msra.mxu0 0.0
        %612 = vmatprep.subr.mxu0 0.0
        %613 = vmatpush2.msra.mxu0 0.0
        %614 = vmatprep.subr.mxu0 0.0
        %615 = vmatpush2.msra.mxu0 0.0
        %616 = vmatprep.subr.mxu0 0.0
        %617 = vmatpush2.msra.mxu0 0.0
        %618 = vmatprep.subr.mxu0 0.0
        %619 = vmatpush2.msra.mxu0 0.0
        %620 = vmatprep.subr.mxu0 0.0
        %621 = vmatpush2.msra.mxu0 0.0
        %622 = vmatprep.subr.mxu0 0.0
        %623 = vmatpush2.msra.mxu0 0.0
        %624 = vmatprep.subr.mxu0 0.0
        %625 = vmatpush2.msra.mxu0 0.0
        %626 = vmatprep.subr.mxu0 0.0
        %627 = vmatpush2.msra.mxu0 0.0
        %628 = vmatprep.subr.mxu0 0.0
        %629 = vmatpush2.msra.mxu0 0.0
        %630 = vmatprep.subr.mxu0 0.0
        %631 = vmatpush2.msra.mxu0 0.0
        %632 = vmatprep.subr.mxu0 0.0
        %633 = vmatpush2.msra.mxu0 0.0
        %634 = vmatprep.subr.mxu0 0.0
        %635 = vmatpush2.msra.mxu0 0.0
        %636 = vmatprep.mubr.f32.mxu0 0.0
        %637 = vmatmul.mubr.f32.gmra.mxu0 %v554
        %v638 = vpop.f32.mrf.mxu0
        %v639 = vadd.f32 0.0, %v638
        %v640 = vpop.f32.mrf.mxu0
        %641 = vdwg.mxu0
        %v642 = vadd.f32 %v555, %v639
        %643 = vst [vmem:[#allocation2] sm:$0xff] %v642
        %p644 = scmp.eq.s32.totalorder %s23, 3
        // Predicated region
        $region87: #{mlp_forward.1} parent=77 // pred_check
          %p645 = pneg %p644
        $region88: #{mlp_forward.1} parent=77 // pred_check_branch
          %647 = sbr.rel (%p645) target = $region90
        $region89: #{mlp_forward.1} parent=77 // pred_region
          %v648 = vld [vmem:[#allocation2] sm:$0xff]
          %v649 = vld [vmem:[%s424] sm:$0x1]
          %v651 = vlaneseq
          %v652 = vshrl.u32 %v651, 7
          %v653 = vsub.s32 0, %v652
          %v654 = vrot.slane %v649, %v653
          %v656 = vadd.f32 %v648, %v654
          %657 = vst [vmem:[#allocation4] sm:$0xff] %v656
        $region90: #{mlp_forward.1} parent=77 // pred_fallthru
          _
        // Predicated region
        $region91: #{mlp_forward.1} parent=77 // pred_check
          %p658 = pneg %p201
        $region92: #{mlp_forward.1} parent=77 // pred_check_branch
          %660 = sbr.rel (%p658) target = $region94
        $region93: #{mlp_forward.1} parent=77 // pred_region
          %s662 = ssub.s32 128, 128
          %663 = vsyncadd [#allocation5], %s662
          %s664 = smul.addr %s22, 128
          %s665 = scalar_lea.hbm %s6, %s664
          %s667 = sshll.u32 [#allocation4], 4
          %s668 = int_to_ptr.vmem [resolvable:$true] %s667
          %670 = dma.vmem_to_hbm [thread:$0]  %s668, 128, %s665, [#allocation5]
        $region94: #{mlp_forward.1} parent=77 // pred_fallthru
          _
        // Predicated region
        $region95: #{mlp_forward.1} parent=77 // pred_check
          %p671 = pneg %p201
        $region96: #{mlp_forward.1} parent=77 // pred_check_branch
          %673 = sbr.rel (%p671) target = $region98
        $region97: #{mlp_forward.1} parent=77 // pred_region
          %674 = dma.done [#allocation5], 128
        $region98: #{mlp_forward.1} parent=77 // pred_fallthru
          _
      $region78: #{mlp_forward.1} parent=5 // pred_fallthru
        _
      %p675 = scmp.le.s32.totalorder 2, %s13
      // Predicated region
      $region99: #{mlp_forward.1} parent=5 // pred_check
        %p676 = pneg %p675
      $region100: #{mlp_forward.1} parent=5 // pred_check_branch
        %678 = sbr.rel (%p676) target = $region102
      $region101: #{mlp_forward.1} parent=5 // pred_region
        %s679 = ssub.s32 %s13, 2
      $region102: #{mlp_forward.1} parent=5 // pred_fallthru
        _
    $region6: #{mlp_forward.1} parent=1 // loop_footer
      %s17 = sadd.s32 1, %s13
    $region7: #{mlp_forward.1} parent=1 // loop_footer_branch
      %12 = sbr.rel target = $region3
    $region8: #{mlp_forward.1} parent=1 // loop_exit
      _
    %680 = vsyncpa [#allocation5], 1
    %s681 = scalar_lea.sflag [#allocation5], 1
    %682 = vsyncpa %s681, 1

</llo_original>
